<compile_context>
chip_gen: v6e
topology: v6e:2x2x1
jax: 0.10.0
libtpu: 0.0.40
codegen_flags: <defaults>
</compile_context>

<pallas_src>
import math

import jax
import jax.numpy as jnp
from jax.experimental import pallas as pl
from jax.experimental.pallas import tpu as pltpu


def _make_pos_emb(length: int, emb: int) -> jnp.ndarray:
    """Reproduces PositionalEmbedding._make_pos_emb (float32)."""
    position = jnp.arange(0, length, dtype=jnp.float32)[:, None]            # [L, 1]
    div_term = jnp.exp(
        jnp.arange(0, emb, 2, dtype=jnp.float32) * (-math.log(10000.0) / emb)
    )                                                                        # [ceil(E/2)]
    angles = position * div_term                                             # [L, ceil(E/2)]
    pe = jnp.zeros((length, emb), dtype=jnp.float32)
    pe = pe.at[:, 0::2].set(jnp.sin(angles))
    pe = pe.at[:, 1::2].set(jnp.cos(angles[:, : emb // 2]))
    return pe


def _add_pos_emb_kernel(x_ref, pe_ref, o_ref):
    # x_ref / o_ref: (tb, tn) tile of the flattened (B, L*E) tensor.
    # pe_ref: (1, tn) f32 slice of the positional table (broadcast over rows).
    # Compute in f32 (torch adds an f32 buffer), downcast on store.
    x = x_ref[...].astype(jnp.float32)
    o_ref[...] = (x + pe_ref[...]).astype(o_ref.dtype)


def _round_up(v: int, m: int) -> int:
    return (v + m - 1) // m * m


def _choose_blocks(B: int, N: int, itemsize: int, max_block_bytes: int):
    """Pick (tb, tn) blocks for the flattened (B, N) layout, sized from padded bytes."""
    sublane = {1: 32, 2: 16, 4: 8}.get(itemsize, 8)       # sub-32-bit dtypes pack on sublanes
    padded_n = _round_up(N, 128)
    row_bytes = padded_n * itemsize                        # one lane-padded row

    if sublane * row_bytes > max_block_bytes:
        # Even one sublane-group of rows overflows the cap: also tile the feature axis.
        tb = B if B < sublane else sublane
        tn = (max_block_bytes // (sublane * itemsize)) // 128 * 128
        tn = max(128, min(tn, padded_n))
        if tn >= N:
            tn = N
        return tb, tn

    tn = N                                                 # full, lane-dense feature extent
    groups = max(1, max_block_bytes // (sublane * row_bytes))
    tb = groups * sublane
    if tb >= B:
        tb = B
        # Give the 'parallel' batch axis >= 2 steps when there is enough work to amortize
        # the ~0.35us/step overhead, so v7x's two TensorCores both get a shard.
        if B >= 2 * sublane and B * row_bytes >= (4 << 20):
            tb = _round_up(pl.cdiv(B, 2), sublane)
    return tb, tn


def positional_embedding_forward(x: jnp.ndarray, pos_emb: jnp.ndarray,
                                 *, max_block_bytes: int = 8 << 20) -> jnp.ndarray:
    """x: [B, L, E]; pos_emb: [L, E] (f32). Returns x + pos_emb broadcast over batch."""
    B, L, E = x.shape
    assert pos_emb.shape == (L, E)
    N = L * E

    # Lane-densify: flatten (L, E) -> N so the last dim is dense even when E % 128 != 0.
    x2 = x.reshape(B, N)
    pe2 = pos_emb.astype(jnp.float32).reshape(1, N)

    itemsize = jnp.dtype(x.dtype).itemsize
    tb, tn = _choose_blocks(B, N, itemsize, max_block_bytes)
    grid = (pl.cdiv(B, tb), pl.cdiv(N, tn))

    # TODO(synk): torch returns an f32 result when x is bf16/fp16 (type promotion);
    # here the output keeps x.dtype (computed in f32, downcast on store).
    out2 = pl.pallas_call(
        _add_pos_emb_kernel,
        out_shape=jax.ShapeDtypeStruct((B, N), x.dtype),
        grid_spec=pltpu.PrefetchScalarGridSpec(
            num_scalar_prefetch=0,
            grid=grid,
            in_specs=[
                pl.BlockSpec((tb, tn), lambda b, n: (b, n)),
                pl.BlockSpec((1, tn), lambda b, n: (0, n)),   # pe resident across batch steps
            ],
            out_specs=pl.BlockSpec((tb, tn), lambda b, n: (b, n)),
        ),
        input_output_aliases={0: 0},                          # out may reuse x's HBM buffer
        compiler_params=pltpu.CompilerParams(
            dimension_semantics=("parallel", "parallel"),
            vmem_limit_bytes=48 << 20,                        # headroom under v7x's 64 MiB
        ),
    )(x2, pe2)

    return out2.reshape(B, L, E)


if __name__ == "__main__":
    # Module defaults: length=6, emb=300.
    batch, length, emb = 4, 6, 300

    key = jax.random.PRNGKey(0)
    x = jax.random.normal(key, (batch, length, emb), dtype=jnp.float32)
    pos_emb = _make_pos_emb(length, emb)

    out = jax.block_until_ready(positional_embedding_forward(x, pos_emb))
    ref = x + pos_emb[None, :, :]
    assert out.shape == (batch, length, emb)
    assert jnp.allclose(out, ref, atol=1e-6), "mismatch vs reference"

    # Exercise the multi-block paths (partial batch tail + feature-axis tiling) by
    # shrinking the block cap, still at small shapes.
    x_big = jax.random.normal(jax.random.PRNGKey(1), (20, length, emb), dtype=jnp.float32)
    out_big = jax.block_until_ready(
        positional_embedding_forward(x_big, pos_emb, max_block_bytes=32 * 1024))
    ref_big = x_big + pos_emb[None, :, :]
    assert jnp.allclose(out_big, ref_big, atol=1e-6), "mismatch vs reference (tiled path)"

    print("KERNEL_OK")
</pallas_src>

<mosaic_0001>
module attributes {stable_mosaic.version = 11 : i64} {
  func.func @_add_pos_emb_kernel(%arg0: i32, %arg1: i32, %arg2: memref<4x1800xf32, #tpu.memory_space<vmem>>, %arg3: memref<1x1800xf32, #tpu.memory_space<vmem>>, %arg4: memref<4x1800xf32, #tpu.memory_space<vmem>>) attributes {dimension_semantics = [#tpu.dimension_semantics<parallel>, #tpu.dimension_semantics<parallel>], iteration_bounds = array<i64: 1, 1>, scalar_prefetch = 0 : i64, scratch_operands = 0 : i64, tpu.core_type = #tpu.core_type<tc>, window_params = [{transform_indices = @transform_0, window_bounds = array<i64: 4, 1800>}, {transform_indices = @transform_1, window_bounds = array<i64: 1, 1800>}, {transform_indices = @transform_2, window_bounds = array<i64: 4, 1800>}]} {
    %c0 = arith.constant 0 : index
    %c0_0 = arith.constant 0 : index
    %0 = vector.load %arg2[%c0, %c0_0] : memref<4x1800xf32, #tpu.memory_space<vmem>>, vector<4x1800xf32>
    %c0_1 = arith.constant 0 : index
    %c0_2 = arith.constant 0 : index
    %1 = vector.load %arg3[%c0_1, %c0_2] : memref<1x1800xf32, #tpu.memory_space<vmem>>, vector<1x1800xf32>
    %2 = vector.broadcast %1 : vector<1x1800xf32> to vector<4x1800xf32>
    %3 = arith.addf %0, %2 : vector<4x1800xf32>
    %c0_3 = arith.constant 0 : index
    %c0_4 = arith.constant 0 : index
    %4 = vector.load %arg4[%c0_3, %c0_4] : memref<4x1800xf32, #tpu.memory_space<vmem>>, vector<4x1800xf32>
    tpu.vector_store %arg4[%c0_3, %c0_4], %3 {strides = array<i32>} : memref<4x1800xf32, #tpu.memory_space<vmem>>, vector<4x1800xf32>,
    return
  }
  func.func @transform_0(%arg0: i32, %arg1: i32) -> (i32, i32) {
    %c0_i32 = arith.constant 0 : i32
    return %arg0, %arg1 : i32, i32
  }
  func.func @transform_1(%arg0: i32, %arg1: i32) -> (i32, i32) {
    %c0_i32 = arith.constant 0 : i32
    %c0_i32_0 = arith.constant 0 : i32
    return %c0_i32, %arg1 : i32, i32
  }
  func.func @transform_2(%arg0: i32, %arg1: i32) -> (i32, i32) {
    %c0_i32 = arith.constant 0 : i32
    return %arg0, %arg1 : i32, i32
  }
}

</mosaic_0001>

<llo_original>
// kernel: tpu_custom_call.1
$region0: #{tpu_custom_call.1}
  #allocation0 [shape = 'u32[]', space=smem, size = 0x4, offset = 0x4, fixed_abs, tag = 'smem constant byte address 0x4 - core index']
  #allocation1 [shape = 'u32[144,128]{1,0:T(1,128)}', space=vmem, size = 0x12000, scoped, tag = 'internal scratch']
  %s0 = inlined_call_operand.hbm [shape: f32[4,1800], index: 0, kind: input, shape index: {}, may-alias: {0,2}]
  %s1 = inlined_call_operand.vmem [shape: f32[1,1800], index: 1, kind: input, shape index: {}]
  %s2 = inlined_call_operand.hbm [shape: f32[4,1800], index: 2, kind: output, shape index: {}, may-alias: {0,2}]
  %s3 = sld [smem:[#allocation0]]
  $region22: #{tpu_custom_call.1} parent=0
    _
  %s5 = ssub.s32 1, %s3
  %s6 = scalar_select 0, %s5, %s3
  $region1: #{tpu_custom_call.1} parent=0
    #allocation2 [shape = 'u8[30720]{0}', space=vmem, size = 0x7800, scoped, tag = 'input window, operand 0, single buffered']
    #allocation3 [shape = 's32[1]{0}', space=sflag, size = 0x4, scoped, tag = 'scoped memory for tpu_custom_call.1']
    #allocation4 [shape = 's32[1]{0}', space=sflag, size = 0x4, scoped, tag = 'scoped memory for tpu_custom_call.1']
    #allocation5 [shape = 'u8[30720]{0}', space=vmem, size = 0x7800, scoped, tag = 'output window, operand 0, single buffered']
    %7 = vsyncpa [#allocation3], 0
    %8 = vsyncpa [#allocation4], 0
    // Predicated region
    $region2: #{tpu_custom_call.1} parent=1 // pred_check
      _
    $region3: #{tpu_custom_call.1} parent=1 // pred_check_branch
      %10 = sbr.rel (0) target = $region5
    $region4: #{tpu_custom_call.1} parent=1 // pred_region
      %s12 = ssub.s32 960, 960
      %13 = vsyncadd [#allocation3], %s12
      %s15 = sshll.u32 [#allocation2], 4
      %s16 = int_to_ptr.vmem [resolvable:$true] %s15
      %18 = dma.hbm_to_vmem [thread:$0]  %s0, 960, %s16, [#allocation3]
    $region5: #{tpu_custom_call.1} parent=1 // pred_fallthru
      _
    // Predicated region
    $region6: #{tpu_custom_call.1} parent=1 // pred_check
      _
    $region7: #{tpu_custom_call.1} parent=1 // pred_check_branch
      %20 = sbr.rel (0) target = $region9
    $region8: #{tpu_custom_call.1} parent=1 // pred_region
      _
    $region9: #{tpu_custom_call.1} parent=1 // pred_fallthru
      _
    // Predicated region
    $region10: #{tpu_custom_call.1} parent=1 // pred_check
      _
    $region11: #{tpu_custom_call.1} parent=1 // pred_check_branch
      %22 = sbr.rel (0) target = $region13
    $region12: #{tpu_custom_call.1} parent=1 // pred_region
      %23 = dma.done [#allocation3], 960
    $region13: #{tpu_custom_call.1} parent=1 // pred_fallthru
      _
    %v24 = vld [vmem:[#allocation2] sm:$0xff]
    %v25 = vld [vmem:[#allocation2 + $0x8] sm:$0xff]
    %v26 = vld [vmem:[#allocation2 + $0x10] sm:$0xff]
    %v27 = vld [vmem:[#allocation2 + $0x18] sm:$0xff]
    %v28 = vld [vmem:[#allocation2 + $0x20] sm:$0xff]
    %v29 = vld [vmem:[#allocation2 + $0x28] sm:$0xff]
    %v30 = vld [vmem:[#allocation2 + $0x30] sm:$0xff]
    %v31 = vld [vmem:[#allocation2 + $0x38] sm:$0xf]
    %v32 = vld [vmem:[%s1] sm:$0xff]
    %v33 = vld [vmem:[%s1 + $0x8] sm:$0x7f]
    %v36 = vlaneseq
    %v37 = vshrl.u32 %v36, 7
    %v38 = vsub.s32 0, %v37
    %v39 = vrot.slane %v32, %v38
    %v40 = vlaneseq
    %v41 = vshrl.u32 %v40, 7
    %v42 = vsub.s32 1, %v41
    %v43 = vrot.slane %v32, %v42
    %v44 = vlaneseq
    %v45 = vshrl.u32 %v44, 7
    %v46 = vsub.s32 2, %v45
    %v47 = vrot.slane %v32, %v46
    %v48 = vlaneseq
    %v49 = vshrl.u32 %v48, 7
    %v50 = vsub.s32 3, %v49
    %v51 = vrot.slane %v32, %v50
    %v52 = vlaneseq
    %v53 = vshrl.u32 %v52, 7
    %v54 = vsub.s32 4, %v53
    %v55 = vrot.slane %v32, %v54
    %v56 = vlaneseq
    %v57 = vshrl.u32 %v56, 7
    %v58 = vsub.s32 5, %v57
    %v59 = vrot.slane %v32, %v58
    %v60 = vlaneseq
    %v61 = vshrl.u32 %v60, 7
    %v62 = vsub.s32 6, %v61
    %v63 = vrot.slane %v32, %v62
    %v64 = vlaneseq
    %v65 = vshrl.u32 %v64, 7
    %v66 = vsub.s32 7, %v65
    %v67 = vrot.slane %v32, %v66
    %v68 = vlaneseq
    %v69 = vshrl.u32 %v68, 7
    %v70 = vsub.s32 0, %v69
    %v71 = vrot.slane %v33, %v70
    %v72 = vlaneseq
    %v73 = vshrl.u32 %v72, 7
    %v74 = vsub.s32 1, %v73
    %v75 = vrot.slane %v33, %v74
    %v76 = vlaneseq
    %v77 = vshrl.u32 %v76, 7
    %v78 = vsub.s32 2, %v77
    %v79 = vrot.slane %v33, %v78
    %v80 = vlaneseq
    %v81 = vshrl.u32 %v80, 7
    %v82 = vsub.s32 3, %v81
    %v83 = vrot.slane %v33, %v82
    %v84 = vlaneseq
    %v85 = vshrl.u32 %v84, 7
    %v86 = vsub.s32 4, %v85
    %v87 = vrot.slane %v33, %v86
    %v88 = vlaneseq
    %v89 = vshrl.u32 %v88, 7
    %v90 = vsub.s32 5, %v89
    %v91 = vrot.slane %v33, %v90
    %v92 = vlaneseq
    %v93 = vshrl.u32 %v92, 7
    %v94 = vsub.s32 6, %v93
    %v95 = vrot.slane %v33, %v94
    %v97 = vcombine.low %v39, %v43
    %v98 = vcombine.low %v47, %v51
    %v99 = vcombine.low %v55, %v59
    %v100 = vcombine.low %v63, %v67
    %v101 = vcombine.low %v71, %v75
    %v102 = vcombine.low %v79, %v83
    %v103 = vcombine.low %v87, %v91
    %v111 = vadd.f32 %v24, %v97
    %v112 = vadd.f32 %v25, %v98
    %v113 = vadd.f32 %v26, %v99
    %v114 = vadd.f32 %v27, %v100
    %v115 = vadd.f32 %v28, %v101
    %v116 = vadd.f32 %v29, %v102
    %v117 = vadd.f32 %v30, %v103
    %v118 = vadd.f32 %v31, %v95
    %119 = vst [vmem:[#allocation5] sm:$0xff] %v111
    %120 = vst [vmem:[#allocation5 + $0x8] sm:$0xff] %v112
    %121 = vst [vmem:[#allocation5 + $0x10] sm:$0xff] %v113
    %122 = vst [vmem:[#allocation5 + $0x18] sm:$0xff] %v114
    %123 = vst [vmem:[#allocation5 + $0x20] sm:$0xff] %v115
    %124 = vst [vmem:[#allocation5 + $0x28] sm:$0xff] %v116
    %125 = vst [vmem:[#allocation5 + $0x30] sm:$0xff] %v117
    %vm126 = vcmask 60416
    %127 = vst.msk [vmem:[#allocation5 + $0x38] sm:$0xf] %vm126, %v118
    // Predicated region
    $region14: #{tpu_custom_call.1} parent=1 // pred_check
      _
    $region15: #{tpu_custom_call.1} parent=1 // pred_check_branch
      %129 = sbr.rel (0) target = $region17
    $region16: #{tpu_custom_call.1} parent=1 // pred_region
      %s131 = ssub.s32 960, 960
      %132 = vsyncadd [#allocation4], %s131
      %s134 = sshll.u32 [#allocation5], 4
      %s135 = int_to_ptr.vmem [resolvable:$true] %s134
      %137 = dma.vmem_to_hbm [thread:$0]  %s135, 960, %s2, [#allocation4]
    $region17: #{tpu_custom_call.1} parent=1 // pred_fallthru
      _
    // Predicated region
    $region18: #{tpu_custom_call.1} parent=1 // pred_check
      _
    $region19: #{tpu_custom_call.1} parent=1 // pred_check_branch
      %139 = sbr.rel (0) target = $region21
    $region20: #{tpu_custom_call.1} parent=1 // pred_region
      %140 = dma.done [#allocation4], 960
    $region21: #{tpu_custom_call.1} parent=1 // pred_fallthru
      _
    %141 = vsyncpa [#allocation3], 1
    %142 = vsyncpa [#allocation4], 1

</llo_original>
